<compile_context>
chip_gen: v5e
topology: v5e:2x2
jax: 0.10.0
libtpu: 0.0.40
codegen_flags: <defaults>
</compile_context>

<pallas_src>
import jax
import jax.numpy as jnp
from jax.experimental import pallas as pl
from jax.experimental.pallas import tpu as pltpu

ORDER = 3                      # matches the KlayGE sample (cubic-by-cubic fit)
N_COEF = ORDER + 1             # n
NUM_FACTORS = N_COEF * N_COEF  # n*n weights

LANES = 128
DEFAULT_TILE_ROWS = 8192       # 8 MiB f32 input block + 4 MiB output block
MIN_GRID_STEPS = 4             # >=2 steps per TensorCore on dual-TC chips (v7x)


def _brdf_kernel(w_ref, x_ref, o_ref):
    """Elementwise bivariate Horner polynomial.

    w_ref : SMEM (NUM_FACTORS,) f32   scalar-prefetched coefficients
    x_ref : VMEM (2, R, 128)          x_ref[0] = n_dot_v, x_ref[1] = glossiness
    o_ref : VMEM (R, 128)             result tile (same dtype as input)
    """
    ndv = x_ref[0].astype(jnp.float32)
    g = x_ref[1].astype(jnp.float32)
    n = N_COEF

    # dim_x[y] = Horner in glossiness with coeffs weights[y*n + 0 .. y*n + n-1]
    dim_x = []
    for y in range(n):
        if n == 1:
            tmp = jnp.full_like(g, w_ref[0])
        else:
            # Start with a multiply-add instead of materializing a
            # broadcast-zero tile (JAX does not CSE broadcast_in_dim).
            # Mathematically identical to the PyTorch addcmul chain
            # (w + tmp*g); if Mosaic fuses it into a single-rounding FMA the
            # result may differ from torch by <= 1 ulp, well inside the test
            # tolerance.
            tmp = w_ref[y * n] * g + w_ref[y * n + 1]
            for k in range(2, n):
                tmp = tmp * g + w_ref[y * n + k]
        dim_x.append(tmp)

    # dim_y = Horner in n_dot_v with "coefficients" dim_x[0..n-1]
    dim_y = dim_x[0]
    for k in range(1, n):
        dim_y = dim_y * ndv + dim_x[k]

    o_ref[...] = dim_y.astype(o_ref.dtype)


def _brdf_pallas(weights, x3, tile_rows, vmem_limit_bytes):
    """x3: (2, nr, 128) SoA slab; returns (nr, 128) of the same dtype."""
    nr = x3.shape[1]
    grid = (pl.cdiv(nr, tile_rows),)
    total = nr * LANES
    itemsize = x3.dtype.itemsize
    cost = pl.CostEstimate(
        flops=2 * (N_COEF * (N_COEF - 1) + (N_COEF - 1)) * total,  # 15 FMAs/elem
        transcendentals=0,
        bytes_accessed=(2 * itemsize + itemsize) * total,
    )
    return pl.pallas_call(
        _brdf_kernel,
        out_shape=jax.ShapeDtypeStruct((nr, LANES), x3.dtype),
        grid_spec=pltpu.PrefetchScalarGridSpec(
            # Coefficients land in SMEM once, before the grid runs.
            num_scalar_prefetch=1,
            grid=grid,
            in_specs=[
                pl.BlockSpec((2, tile_rows, LANES), lambda i, w: (0, i, 0)),
            ],
            out_specs=pl.BlockSpec((tile_rows, LANES), lambda i, w: (i, 0)),
        ),
        compiler_params=pltpu.CompilerParams(
            dimension_semantics=("parallel",),
            vmem_limit_bytes=vmem_limit_bytes,
        ),
        cost_estimate=cost,
    )(weights, x3)


def integrated_brdf_expression_soa(x_soa, weights, *, tile_rows=DEFAULT_TILE_ROWS):
    """Fast path.  x_soa: (2, N) with row 0 = n_dot_v, row 1 = glossiness.

    dtype of x_soa is preserved end-to-end (f32 default; bf16 halves HBM
    traffic, compute stays f32 in-kernel).
    """
    assert x_soa.ndim == 2 and x_soa.shape[0] == 2
    n_samples = x_soa.shape[1]
    n_pad = (-n_samples) % LANES
    if n_pad:
        x_soa = jnp.pad(x_soa, ((0, 0), (0, n_pad)))
    nr = (n_samples + n_pad) // LANES

    # Tile selection: as big as possible (amortise per-step overhead), but
    # capped so big inputs always give >= MIN_GRID_STEPS grid steps (so v7x's
    # two TensorCores both get work on the "parallel" axis).
    tr = min(int(tile_rows), nr)
    if nr >= MIN_GRID_STEPS * 8:
        cap = ((pl.cdiv(nr, MIN_GRID_STEPS) + 7) // 8) * 8
        tr = min(tr, cap)
    if tr != nr and tr % 8:            # keep (8,128) block constraint satisfied
        tr = max(8, (tr // 8) * 8)

    x3 = x_soa.reshape(2, nr, LANES)

    # Double-buffered working set: 2 * (2 input planes + 1 output plane).
    # Default f32 tile: 24 MiB + 8 MiB headroom = 32 MiB -> safe on v7x's
    # 64 MiB per-core VMEM and raises v5e's 16 MiB scoped default.
    buf_set_bytes = 3 * tr * LANES * x3.dtype.itemsize
    vmem_limit = min(100 * 1024 * 1024, 2 * buf_set_bytes + (8 << 20))

    out = _brdf_pallas(weights.astype(jnp.float32), x3, tr, vmem_limit)
    return out.reshape(nr * LANES)[:n_samples]


def integrated_brdf_expression(x, weights, *, tile_rows=DEFAULT_TILE_ROWS):
    """PyTorch-layout wrapper: x is (N, 2), col 0 = n_dot_v, col 1 = glossiness.

    The AoS -> SoA conversion below is one extra HBM pass outside the kernel.
    Producers that can emit (2, N) should call integrated_brdf_expression_soa.
    """
    # TODO(synk): fuse the AoS->SoA lane deinterleave into the kernel once
    # Mosaic supports an efficient stride-2 lane split; a roll+select version
    # would double VALU work and still need a lane compaction for the output.
    assert x.ndim == 2 and x.shape[1] == 2
    return integrated_brdf_expression_soa(jnp.transpose(x), weights,
                                          tile_rows=tile_rows)


def _reference(x, weights):
    """Pure-JAX reference reproducing the PyTorch forward exactly (f32)."""
    x = x.astype(jnp.float32)
    n_dot_v = x[:, 0:1]
    gloss = x[:, 1:2]
    n = N_COEF
    dim_x = []
    for y in range(n):
        tmp = jnp.broadcast_to(weights[y * n], gloss.shape)
        for k in range(1, n):
            tmp = weights[y * n + k] + tmp * gloss
        dim_x.append(tmp)
    dim_y = dim_x[0]
    for k in range(1, n):
        dim_y = dim_x[k] + dim_y * n_dot_v
    return jnp.squeeze(dim_y, axis=1)


if __name__ == "__main__":
    key = jax.random.PRNGKey(0)
    k_w, k_x = jax.random.split(key)

    # Deterministic stand-in for torch.distributions.Uniform(0, 5).sample((n*n,))
    weights = jax.random.uniform(
        k_w, (NUM_FACTORS,), dtype=jnp.float32, minval=0.0, maxval=5.0
    )

    ok = True
    # (N, tile_rows): divisible single block, ragged lane padding, multi-step
    # grid with a partial last block, and a case that triggers the multi-core
    # grid cap (grid of 4 steps with a ragged final block).
    for n_samples, tr in ((1024, DEFAULT_TILE_ROWS),
                          (1000, DEFAULT_TILE_ROWS),
                          (2560, 8),
                          (25600, DEFAULT_TILE_ROWS)):
        k_x, sub = jax.random.split(k_x)
        x = jax.random.uniform(sub, (n_samples, 2), dtype=jnp.float32)
        out = jax.block_until_ready(
            integrated_brdf_expression(x, weights, tile_rows=tr))
        ref = _reference(x, weights)
        assert out.shape == (n_samples,)
        ok &= bool(jnp.allclose(out, ref, rtol=1e-5, atol=1e-5))

    # bf16 I/O variant (halves HBM bytes where bandwidth binds). Compute stays
    # f32 in-kernel, so only the output cast differs from the f32 reference on
    # identically-quantized inputs.
    k_x, sub = jax.random.split(k_x)
    x_soa_b = jax.random.uniform(sub, (2, 2048), dtype=jnp.float32).astype(jnp.bfloat16)
    out_b = jax.block_until_ready(
        integrated_brdf_expression_soa(x_soa_b, weights))
    ref_b = _reference(x_soa_b.T.astype(jnp.float32), weights)
    assert out_b.dtype == jnp.bfloat16 and out_b.shape == (2048,)
    ok &= bool(jnp.allclose(out_b.astype(jnp.float32), ref_b, rtol=2e-2, atol=2e-2))

    assert ok, "mismatch vs reference"
    print("KERNEL_OK")
</pallas_src>

<mosaic_0001>
module attributes {stable_mosaic.version = 11 : i64} {
  func.func @_brdf_kernel(%arg0: i32, %arg1: memref<16xf32, #tpu.memory_space<smem>>, %arg2: memref<2x8x128xf32, #tpu.memory_space<vmem>>, %arg3: memref<8x128xf32, #tpu.memory_space<vmem>>) attributes {dimension_semantics = [#tpu.dimension_semantics<parallel>], iteration_bounds = array<i64: 1>, scalar_prefetch = 1 : i64, scratch_operands = 0 : i64, tpu.core_type = #tpu.core_type<tc>, window_params = [{transform_indices = @transform_0, window_bounds = array<i64: 2, 8, 128>}, {transform_indices = @transform_1, window_bounds = array<i64: 8, 128>}]} {
    %c0 = arith.constant 0 : index
    %c0_0 = arith.constant 0 : index
    %c0_1 = arith.constant 0 : index
    %0 = vector.load %arg2[%c0, %c0_0, %c0_1] : memref<2x8x128xf32, #tpu.memory_space<vmem>>, vector<1x8x128xf32>
    %1 = vector.shape_cast %0 : vector<1x8x128xf32> to vector<8x128xf32>
    %c1 = arith.constant 1 : index
    %c0_2 = arith.constant 0 : index
    %c0_3 = arith.constant 0 : index
    %2 = vector.load %arg2[%c1, %c0_2, %c0_3] : memref<2x8x128xf32, #tpu.memory_space<vmem>>, vector<1x8x128xf32>
    %3 = vector.shape_cast %2 : vector<1x8x128xf32> to vector<8x128xf32>
    %c0_4 = arith.constant 0 : index
    %4 = memref.load %arg1[%c0_4] : memref<16xf32, #tpu.memory_space<smem>>
    %5 = vector.broadcast %4 : f32 to vector<8x128xf32>
    %6 = arith.mulf %5, %3 : vector<8x128xf32>
    %c1_5 = arith.constant 1 : index
    %7 = memref.load %arg1[%c1_5] : memref<16xf32, #tpu.memory_space<smem>>
    %8 = vector.broadcast %7 : f32 to vector<8x128xf32>
    %9 = arith.addf %6, %8 : vector<8x128xf32>
    %10 = arith.mulf %9, %3 : vector<8x128xf32>
    %c2 = arith.constant 2 : index
    %11 = memref.load %arg1[%c2] : memref<16xf32, #tpu.memory_space<smem>>
    %12 = vector.broadcast %11 : f32 to vector<8x128xf32>
    %13 = arith.addf %10, %12 : vector<8x128xf32>
    %14 = arith.mulf %13, %3 : vector<8x128xf32>
    %c3 = arith.constant 3 : index
    %15 = memref.load %arg1[%c3] : memref<16xf32, #tpu.memory_space<smem>>
    %16 = vector.broadcast %15 : f32 to vector<8x128xf32>
    %17 = arith.addf %14, %16 : vector<8x128xf32>
    %c4 = arith.constant 4 : index
    %18 = memref.load %arg1[%c4] : memref<16xf32, #tpu.memory_space<smem>>
    %19 = vector.broadcast %18 : f32 to vector<8x128xf32>
    %20 = arith.mulf %19, %3 : vector<8x128xf32>
    %c5 = arith.constant 5 : index
    %21 = memref.load %arg1[%c5] : memref<16xf32, #tpu.memory_space<smem>>
    %22 = vector.broadcast %21 : f32 to vector<8x128xf32>
    %23 = arith.addf %20, %22 : vector<8x128xf32>
    %24 = arith.mulf %23, %3 : vector<8x128xf32>
    %c6 = arith.constant 6 : index
    %25 = memref.load %arg1[%c6] : memref<16xf32, #tpu.memory_space<smem>>
    %26 = vector.broadcast %25 : f32 to vector<8x128xf32>
    %27 = arith.addf %24, %26 : vector<8x128xf32>
    %28 = arith.mulf %27, %3 : vector<8x128xf32>
    %c7 = arith.constant 7 : index
    %29 = memref.load %arg1[%c7] : memref<16xf32, #tpu.memory_space<smem>>
    %30 = vector.broadcast %29 : f32 to vector<8x128xf32>
    %31 = arith.addf %28, %30 : vector<8x128xf32>
    %c8 = arith.constant 8 : index
    %32 = memref.load %arg1[%c8] : memref<16xf32, #tpu.memory_space<smem>>
    %33 = vector.broadcast %32 : f32 to vector<8x128xf32>
    %34 = arith.mulf %33, %3 : vector<8x128xf32>
    %c9 = arith.constant 9 : index
    %35 = memref.load %arg1[%c9] : memref<16xf32, #tpu.memory_space<smem>>
    %36 = vector.broadcast %35 : f32 to vector<8x128xf32>
    %37 = arith.addf %34, %36 : vector<8x128xf32>
    %38 = arith.mulf %37, %3 : vector<8x128xf32>
    %c10 = arith.constant 10 : index
    %39 = memref.load %arg1[%c10] : memref<16xf32, #tpu.memory_space<smem>>
    %40 = vector.broadcast %39 : f32 to vector<8x128xf32>
    %41 = arith.addf %38, %40 : vector<8x128xf32>
    %42 = arith.mulf %41, %3 : vector<8x128xf32>
    %c11 = arith.constant 11 : index
    %43 = memref.load %arg1[%c11] : memref<16xf32, #tpu.memory_space<smem>>
    %44 = vector.broadcast %43 : f32 to vector<8x128xf32>
    %45 = arith.addf %42, %44 : vector<8x128xf32>
    %c12 = arith.constant 12 : index
    %46 = memref.load %arg1[%c12] : memref<16xf32, #tpu.memory_space<smem>>
    %47 = vector.broadcast %46 : f32 to vector<8x128xf32>
    %48 = arith.mulf %47, %3 : vector<8x128xf32>
    %c13 = arith.constant 13 : index
    %49 = memref.load %arg1[%c13] : memref<16xf32, #tpu.memory_space<smem>>
    %50 = vector.broadcast %49 : f32 to vector<8x128xf32>
    %51 = arith.addf %48, %50 : vector<8x128xf32>
    %52 = arith.mulf %51, %3 : vector<8x128xf32>
    %c14 = arith.constant 14 : index
    %53 = memref.load %arg1[%c14] : memref<16xf32, #tpu.memory_space<smem>>
    %54 = vector.broadcast %53 : f32 to vector<8x128xf32>
    %55 = arith.addf %52, %54 : vector<8x128xf32>
    %56 = arith.mulf %55, %3 : vector<8x128xf32>
    %c15 = arith.constant 15 : index
    %57 = memref.load %arg1[%c15] : memref<16xf32, #tpu.memory_space<smem>>
    %58 = vector.broadcast %57 : f32 to vector<8x128xf32>
    %59 = arith.addf %56, %58 : vector<8x128xf32>
    %60 = arith.mulf %17, %1 : vector<8x128xf32>
    %61 = arith.addf %60, %31 : vector<8x128xf32>
    %62 = arith.mulf %61, %1 : vector<8x128xf32>
    %63 = arith.addf %62, %45 : vector<8x128xf32>
    %64 = arith.mulf %63, %1 : vector<8x128xf32>
    %65 = arith.addf %64, %59 : vector<8x128xf32>
    %c0_6 = arith.constant 0 : index
    %c0_7 = arith.constant 0 : index
    %66 = vector.load %arg3[%c0_6, %c0_7] : memref<8x128xf32, #tpu.memory_space<vmem>>, vector<8x128xf32>
    tpu.vector_store %arg3[%c0_6, %c0_7], %65 {strides = array<i32>} : memref<8x128xf32, #tpu.memory_space<vmem>>, vector<8x128xf32>,
    return
  }
  func.func @transform_0(%arg0: i32, %arg1: memref<16xf32, #tpu.memory_space<smem>>) -> (i32, i32, i32) {
    %c0_i32 = arith.constant 0 : i32
    %c0_i32_0 = arith.constant 0 : i32
    %c0_i32_1 = arith.constant 0 : i32
    return %c0_i32, %arg0, %c0_i32_0 : i32, i32, i32
  }
  func.func @transform_1(%arg0: i32, %arg1: memref<16xf32, #tpu.memory_space<smem>>) -> (i32, i32) {
    %c0_i32 = arith.constant 0 : i32
    %c0_i32_0 = arith.constant 0 : i32
    return %arg0, %c0_i32 : i32, i32
  }
}

</mosaic_0001>

<llo_original>
// kernel: tpu_custom_call.1
$region0: #{tpu_custom_call.1}
  #allocation0 [shape = 'u32[]', space=smem, size = 0x4, offset = 0x4, fixed_abs, tag = 'smem constant byte address 0x4 - core index']
  #allocation1 [shape = 'u32[72,128]{1,0:T(1,128)}', space=vmem, size = 0x9000, scoped, tag = 'internal scratch']
  #allocation2 [shape = 's32[1]{0}', space=sflag, size = 0x4, scoped, tag = 'scoped memory for tpu_custom_call.1']
  #allocation3 [shape = 'u8[512]{0}', space=smem, size = 0x200, scoped, tag = 'prefetched SMEM operand 0']
  %s0 = inlined_call_operand.hbm [shape: f32[16], index: 0, kind: input, shape index: {}]
  %s1 = inlined_call_operand.hbm [shape: f32[2,8,128], index: 1, kind: input, shape index: {}]
  %s2 = inlined_call_operand.hbm [shape: f32[8,128], index: 2, kind: output, shape index: {}]
  %s3 = sld [smem:[#allocation0]]
  $region18: #{tpu_custom_call.1} parent=0
    _
  %s5 = ssub.s32 1, %s3
  %s6 = scalar_select 0, %s5, %s3
  %s8 = sshll.u32 %s0, 4
  %s9 = int_to_ptr.hbm [resolvable:$true] %s8
  %11 = dma.hbm_to_smem %s9, 16, [#allocation3], [#allocation2]
  %13 = dma.done [#allocation2], 16
  %14 = sfence
  $region1: #{tpu_custom_call.1} parent=0
    #allocation4 [shape = 'u8[8192]{0}', space=vmem, size = 0x2000, scoped, tag = 'input window, operand 1, single buffered']
    #allocation5 [shape = 's32[1]{0}', space=sflag, size = 0x4, scoped, tag = 'scoped memory for tpu_custom_call.1']
    #allocation6 [shape = 's32[1]{0}', space=sflag, size = 0x4, scoped, tag = 'scoped memory for tpu_custom_call.1']
    #allocation7 [shape = 'u8[4096]{0}', space=vmem, size = 0x1000, scoped, tag = 'output window, operand 0, single buffered']
    %15 = vsyncpa [#allocation5], 0
    %16 = vsyncpa [#allocation6], 0
    // Predicated region
    $region2: #{tpu_custom_call.1} parent=1 // pred_check
      _
    $region3: #{tpu_custom_call.1} parent=1 // pred_check_branch
      %18 = sbr.rel (0) target = $region5
    $region4: #{tpu_custom_call.1} parent=1 // pred_region
      %20 = vsyncadd [#allocation5], 0
      %s21 = sshll.u32 %s1, 4
      %s22 = int_to_ptr.hbm [resolvable:$true] %s21
      %s23 = sshll.u32 [#allocation4], 4
      %s24 = int_to_ptr.vmem [resolvable:$true] %s23
      %29 = dma.hbm_to_vmem [thread:$0]  %s22, 256, %s24, [#allocation5], 128, 128, 8
    $region5: #{tpu_custom_call.1} parent=1 // pred_fallthru
      _
    // Predicated region
    $region6: #{tpu_custom_call.1} parent=1 // pred_check
      _
    $region7: #{tpu_custom_call.1} parent=1 // pred_check_branch
      %31 = sbr.rel (0) target = $region9
    $region8: #{tpu_custom_call.1} parent=1 // pred_region
      %33 = dma.done [#allocation5], 256
    $region9: #{tpu_custom_call.1} parent=1 // pred_fallthru
      _
    %v34 = vld [vmem:[#allocation4] sm:$0xff]
    %s35 = scalar_lea.vmem [#allocation4], 8
    %v36 = vld [vmem:[%s35] sm:$0xff]
    %s37 = sld [smem:[#allocation3]]
    %v38 = vstv %s37
    %v39 = vmul.f32 %v38, %v36
    %s40 = sld [smem:[#allocation3 + $0x1]]
    %v41 = vstv %s40
    %v42 = vadd.f32 %v39, %v41
    %v43 = vmul.f32 %v42, %v36
    %s44 = sld [smem:[#allocation3 + $0x2]]
    %v45 = vstv %s44
    %v46 = vadd.f32 %v43, %v45
    %v47 = vmul.f32 %v46, %v36
    %s48 = sld [smem:[#allocation3 + $0x3]]
    %v49 = vstv %s48
    %v50 = vadd.f32 %v47, %v49
    %s51 = sld [smem:[#allocation3 + $0x4]]
    %v52 = vstv %s51
    %v53 = vmul.f32 %v52, %v36
    %s54 = sld [smem:[#allocation3 + $0x5]]
    %v55 = vstv %s54
    %v56 = vadd.f32 %v53, %v55
    %v57 = vmul.f32 %v56, %v36
    %s58 = sld [smem:[#allocation3 + $0x6]]
    %v59 = vstv %s58
    %v60 = vadd.f32 %v57, %v59
    %v61 = vmul.f32 %v60, %v36
    %s62 = sld [smem:[#allocation3 + $0x7]]
    %v63 = vstv %s62
    %v64 = vadd.f32 %v61, %v63
    %s65 = sld [smem:[#allocation3 + $0x8]]
    %v66 = vstv %s65
    %v67 = vmul.f32 %v66, %v36
    %s68 = sld [smem:[#allocation3 + $0x9]]
    %v69 = vstv %s68
    %v70 = vadd.f32 %v67, %v69
    %v71 = vmul.f32 %v70, %v36
    %s72 = sld [smem:[#allocation3 + $0xa]]
    %v73 = vstv %s72
    %v74 = vadd.f32 %v71, %v73
    %v75 = vmul.f32 %v74, %v36
    %s76 = sld [smem:[#allocation3 + $0xb]]
    %v77 = vstv %s76
    %v78 = vadd.f32 %v75, %v77
    %s79 = sld [smem:[#allocation3 + $0xc]]
    %v80 = vstv %s79
    %v81 = vmul.f32 %v80, %v36
    %s82 = sld [smem:[#allocation3 + $0xd]]
    %v83 = vstv %s82
    %v84 = vadd.f32 %v81, %v83
    %v85 = vmul.f32 %v84, %v36
    %s86 = sld [smem:[#allocation3 + $0xe]]
    %v87 = vstv %s86
    %v88 = vadd.f32 %v85, %v87
    %v89 = vmul.f32 %v88, %v36
    %s90 = sld [smem:[#allocation3 + $0xf]]
    %v91 = vstv %s90
    %v92 = vadd.f32 %v89, %v91
    %v93 = vmul.f32 %v50, %v34
    %v94 = vadd.f32 %v93, %v64
    %v95 = vmul.f32 %v94, %v34
    %v96 = vadd.f32 %v95, %v78
    %v97 = vmul.f32 %v96, %v34
    %v98 = vadd.f32 %v97, %v92
    %99 = vst [vmem:[#allocation7] sm:$0xff] %v98
    // Predicated region
    $region10: #{tpu_custom_call.1} parent=1 // pred_check
      _
    $region11: #{tpu_custom_call.1} parent=1 // pred_check_branch
      %101 = sbr.rel (0) target = $region13
    $region12: #{tpu_custom_call.1} parent=1 // pred_region
      %103 = vsyncadd [#allocation6], 0
      %s105 = sshll.u32 [#allocation7], 4
      %s106 = int_to_ptr.vmem [resolvable:$true] %s105
      %s107 = sshll.u32 %s2, 4
      %s108 = int_to_ptr.hbm [resolvable:$true] %s107
      %110 = dma.vmem_to_hbm [thread:$0]  %s106, 128, %s108, [#allocation6]
    $region13: #{tpu_custom_call.1} parent=1 // pred_fallthru
      _
    // Predicated region
    $region14: #{tpu_custom_call.1} parent=1 // pred_check
      _
    $region15: #{tpu_custom_call.1} parent=1 // pred_check_branch
      %112 = sbr.rel (0) target = $region17
    $region16: #{tpu_custom_call.1} parent=1 // pred_region
      %114 = dma.done [#allocation6], 128
    $region17: #{tpu_custom_call.1} parent=1 // pred_fallthru
      _
    %115 = vsyncpa [#allocation5], 1
    %116 = vsyncpa [#allocation6], 1

</llo_original>
